<compile_context>
chip_gen: v6e
topology: v6e:2x2x1
jax: 0.10.0
libtpu: 0.0.40
codegen_flags: <defaults>
</compile_context>

<pallas_src>
import jax
import jax.numpy as jnp
from jax.experimental import pallas as pl
from jax.experimental.pallas import tpu as pltpu


# ---------------------------------------------------------------------------
# Fused single-pass kernel: one whole batch element (C, HW) resident in VMEM.
# ---------------------------------------------------------------------------
def _cab_fused_kernel(x_ref, w1_ref, w2_ref, o_ref):
    # x_ref : (1, C, HW)  one batch element, HW on the lane axis (lane-dense)
    # w1_ref: (R, C)      fc1 weight (torch Conv2d(C, R, 1).weight squeezed)
    # w2_ref: (C, R)      fc2 weight (torch Conv2d(R, C, 1).weight squeezed)
    x = x_ref[0]                                                     # (C, HW), native dtype

    # Global avg / max pool over spatial (lane reduction). Stats in f32.
    avg = jnp.mean(x, axis=-1, keepdims=True, dtype=jnp.float32)     # (C, 1)
    mx = jnp.max(x, axis=-1, keepdims=True).astype(jnp.float32)      # (C, 1)
    pooled = jnp.concatenate([avg, mx], axis=-1)                     # (C, 2)

    w1 = w1_ref[...].astype(jnp.float32)                             # (R, C)
    w2 = w2_ref[...].astype(jnp.float32)                             # (C, R)

    # One fused fc chain for both branches (tiny; latency-only work).
    h = jnp.maximum(jnp.dot(w1, pooled, preferred_element_type=jnp.float32), 0.0)  # (R, 2)
    fc_out = jnp.dot(w2, h, preferred_element_type=jnp.float32)                    # (C, 2)
    scale = jax.nn.sigmoid(fc_out[:, 0:1] + fc_out[:, 1:2])                        # (C, 1)

    # Apply in the input dtype; broadcast scale over HW (lanes).
    o_ref[0] = (x * scale.astype(x.dtype)).astype(o_ref.dtype)


# ---------------------------------------------------------------------------
# Two-pass spatially tiled path (for feature maps too big for a VMEM block).
# ---------------------------------------------------------------------------
def _cab_pool_kernel(x_ref, sum_ref, max_ref):
    # x_ref: (1, C, T); sum_ref / max_ref: (1, C, 1) accumulators resident
    # across the HW-tile ("arbitrary") grid axis.
    j = pl.program_id(1)

    @pl.when(j == 0)
    def _():
        sum_ref[...] = jnp.zeros_like(sum_ref)
        max_ref[...] = jnp.full_like(max_ref, -jnp.inf)

    xf = x_ref[0].astype(jnp.float32)                                # (C, T)
    sum_ref[0] += jnp.sum(xf, axis=-1, keepdims=True)
    max_ref[0] = jnp.maximum(max_ref[0], jnp.max(xf, axis=-1, keepdims=True))


def _cab_apply_kernel(x_ref, scale_ref, o_ref):
    # x_ref: (1, C, T); scale_ref: (1, C, 1) f32; o_ref: (1, C, T)
    x = x_ref[0]
    s = scale_ref[0].astype(x.dtype)
    o_ref[0] = (x * s).astype(o_ref.dtype)


# ---------------------------------------------------------------------------
# Wrapper
# ---------------------------------------------------------------------------
def _vmem_capacity_bytes():
    try:
        return int(pltpu.get_tpu_info().vmem_capacity_bytes)
    except Exception:
        return 64 * 1024 * 1024   # conservative (v7x per-core VMEM)


def _pick_spatial_tile(HW, C, itemsize, usable_bytes):
    """Largest divisor of HW (preferring multiples of 128) whose double-buffered
    in+out blocks fit the usable VMEM budget."""
    max_t = max(1, (usable_bytes - (2 << 20)) // (4 * C * itemsize))
    best = None
    for d in range(1, int(HW ** 0.5) + 1):
        if HW % d == 0:
            for cand in (d, HW // d):
                if cand <= max_t and (cand % 128 == 0 or cand == HW):
                    if best is None or cand > best:
                        best = cand
    # TODO(synk): support masked partial spatial tiles when HW has no
    # 128-multiple divisor that fits VMEM (rare for DPARNet shapes).
    return best if best is not None else HW


def _cab_fused_call(x, w1, w2, vmem_limit):
    N, C, HW = x.shape
    R = w1.shape[0]
    itemsize = x.dtype.itemsize
    cost = pl.CostEstimate(
        flops=int(N * (3 * C * HW + 8 * C * R)),
        transcendentals=int(N * C),
        bytes_accessed=int(2 * N * C * HW * itemsize + 8 * C * R),
    )
    return pl.pallas_call(
        _cab_fused_kernel,
        out_shape=jax.ShapeDtypeStruct((N, C, HW), x.dtype),
        grid_spec=pl.GridSpec(
            grid=(N,),
            in_specs=[
                pl.BlockSpec((1, C, HW), lambda n: (n, 0, 0)),
                pl.BlockSpec((R, C), lambda n: (0, 0)),
                pl.BlockSpec((C, R), lambda n: (0, 0)),
            ],
            out_specs=pl.BlockSpec((1, C, HW), lambda n: (n, 0, 0)),
        ),
        compiler_params=pltpu.CompilerParams(
            dimension_semantics=("parallel",),
            vmem_limit_bytes=int(vmem_limit),
        ),
        cost_estimate=cost,
    )(x, w1, w2)


def _cab_tiled_call(x, w1, w2, T, capacity):
    N, C, HW = x.shape
    itemsize = x.dtype.itemsize
    assert HW % T == 0, "spatial tile must divide H*W"
    n_hw = HW // T

    # Pass 1: pooled sum & max accumulated across HW tiles.
    pool_limit = int(min(max(2 * C * T * itemsize + (2 << 20), 32 << 20),
                         int(0.9 * capacity)))
    pooled_sum, pooled_max = pl.pallas_call(
        _cab_pool_kernel,
        out_shape=(jax.ShapeDtypeStruct((N, C, 1), jnp.float32),
                   jax.ShapeDtypeStruct((N, C, 1), jnp.float32)),
        grid_spec=pl.GridSpec(
            grid=(N, n_hw),
            in_specs=[pl.BlockSpec((1, C, T), lambda n, j: (n, 0, j))],
            out_specs=(pl.BlockSpec((1, C, 1), lambda n, j: (n, 0, 0)),
                       pl.BlockSpec((1, C, 1), lambda n, j: (n, 0, 0))),
        ),
        compiler_params=pltpu.CompilerParams(
            dimension_semantics=("parallel", "arbitrary"),
            vmem_limit_bytes=pool_limit,
        ),
        cost_estimate=pl.CostEstimate(
            flops=int(2 * N * C * HW), transcendentals=0,
            bytes_accessed=int(N * C * HW * itemsize)),
    )(x)

    # Tiny per-(N, C) fc + sigmoid on pooled stats: plain JAX (negligible work;
    # avoids pushing a sub-tile matmul through the MXU inside the kernel).
    avg = pooled_sum[:, :, 0] / jnp.float32(HW)                      # (N, C)
    mx = pooled_max[:, :, 0]                                         # (N, C)
    w1f = w1.astype(jnp.float32)
    w2f = w2.astype(jnp.float32)

    def fc(p):
        return jnp.maximum(p @ w1f.T, 0.0) @ w2f.T                   # (N, C)

    scale = jax.nn.sigmoid(fc(avg) + fc(mx))[:, :, None]             # (N, C, 1) f32

    # Pass 2: apply the per-channel scale, spatially tiled.
    apply_limit = int(min(max(4 * C * T * itemsize + (2 << 20), 32 << 20),
                          int(0.9 * capacity)))
    out = pl.pallas_call(
        _cab_apply_kernel,
        out_shape=jax.ShapeDtypeStruct((N, C, HW), x.dtype),
        grid_spec=pl.GridSpec(
            grid=(N, n_hw),
            in_specs=[pl.BlockSpec((1, C, T), lambda n, j: (n, 0, j)),
                      pl.BlockSpec((1, C, 1), lambda n, j: (n, 0, 0))],
            out_specs=pl.BlockSpec((1, C, T), lambda n, j: (n, 0, j)),
        ),
        compiler_params=pltpu.CompilerParams(
            dimension_semantics=("parallel", "parallel"),
            vmem_limit_bytes=apply_limit,
        ),
        cost_estimate=pl.CostEstimate(
            flops=int(N * C * HW), transcendentals=0,
            bytes_accessed=int(2 * N * C * HW * itemsize)),
    )(x, scale)
    return out


def cab_forward(x_nchw, w1, w2, *, spatial_tile=None):
    """CAB forward.

    x_nchw: (N, C, H, W)
    w1:     (R, C)  fc1 = Conv2d(C, R, 1, bias=False).weight squeezed
    w2:     (C, R)  fc2 = Conv2d(R, C, 1, bias=False).weight squeezed
    spatial_tile: force the two-pass tiled path with this HW tile (testing).
    """
    N, C, H, W = x_nchw.shape
    HW = H * W
    itemsize = x_nchw.dtype.itemsize

    # Free reshape: NCHW stays native, HW on the lane axis. No transposes.
    x = x_nchw.reshape(N, C, HW)

    capacity = _vmem_capacity_bytes()
    usable = int(0.75 * capacity)

    block_bytes = C * HW * itemsize
    # double-buffered input + output block + weights/internal-scratch slack
    fused_need = 4 * block_bytes + (2 << 20)

    if spatial_tile is None and fused_need <= usable:
        vmem_limit = min(max(fused_need, 32 << 20), int(0.9 * capacity))
        out = _cab_fused_call(x, w1, w2, vmem_limit)
    else:
        T = spatial_tile if spatial_tile is not None else _pick_spatial_tile(
            HW, C, itemsize, usable)
        out = _cab_tiled_call(x, w1, w2, T, capacity)

    return out.reshape(N, C, H, W)


def cab_reference(x, w1, w2):
    """Pure-JAX reference mirroring the PyTorch forward (NCHW)."""
    avg = jnp.mean(x, axis=(2, 3))                           # (N, C)
    mxp = jnp.max(x, axis=(2, 3))                            # (N, C)

    def fc(p):
        h = jnp.maximum(p @ w1.T, 0.0)                       # (N, R)
        return h @ w2.T                                      # (N, C)

    scale = jax.nn.sigmoid(fc(avg) + fc(mxp))                # (N, C)
    return x * scale[:, :, None, None]


if __name__ == "__main__":
    # Module config: in_channels=4 < ratio=16 -> ratio=4, reduced_channels=1,
    # out_channels defaults to in_channels.
    N, C, H, W = 2, 4, 16, 16
    R = 1

    key = jax.random.PRNGKey(0)
    kx, k1, k2 = jax.random.split(key, 3)
    x = jax.random.normal(kx, (N, C, H, W), dtype=jnp.float32)
    # init_weights('normal'): conv weights ~ N(0, 0.02), no bias.
    w1 = 0.02 * jax.random.normal(k1, (R, C), dtype=jnp.float32)   # fc1: Conv2d(C, R, 1)
    w2 = 0.02 * jax.random.normal(k2, (C, R), dtype=jnp.float32)   # fc2: Conv2d(R, C, 1)

    ref = cab_reference(x, w1, w2)

    # Fused single-pass path (default for shapes that fit VMEM).
    out_fused = jax.block_until_ready(cab_forward(x, w1, w2))
    assert out_fused.shape == (N, C, H, W)
    assert jnp.allclose(out_fused, ref, atol=1e-5, rtol=1e-5), "fused path mismatch"

    # Two-pass spatially tiled path (exercised here with a forced tile of 128).
    out_tiled = jax.block_until_ready(cab_forward(x, w1, w2, spatial_tile=128))
    assert jnp.allclose(out_tiled, ref, atol=1e-5, rtol=1e-5), "tiled path mismatch"

    print("KERNEL_OK")
</pallas_src>

<mosaic_0001>
module attributes {stable_mosaic.version = 11 : i64} {
  func.func @_cab_fused_kernel(%arg0: i32, %arg1: memref<1x4x256xf32, #tpu.memory_space<vmem>>, %arg2: memref<1x4xf32, #tpu.memory_space<vmem>>, %arg3: memref<4x1xf32, #tpu.memory_space<vmem>>, %arg4: memref<1x4x256xf32, #tpu.memory_space<vmem>>) attributes {dimension_semantics = [#tpu.dimension_semantics<parallel>], iteration_bounds = array<i64: 2>, scalar_prefetch = 0 : i64, scratch_operands = 0 : i64, tpu.core_type = #tpu.core_type<tc>, window_params = [{transform_indices = @transform_0, window_bounds = array<i64: 1, 4, 256>}, {pipeline_mode = #tpu.pipeline_mode<synchronous>, transform_indices = @transform_1, window_bounds = array<i64: 1, 4>}, {pipeline_mode = #tpu.pipeline_mode<synchronous>, transform_indices = @transform_2, window_bounds = array<i64: 4, 1>}, {transform_indices = @transform_3, window_bounds = array<i64: 1, 4, 256>}]} {
    %c0 = arith.constant 0 : index
    %c0_0 = arith.constant 0 : index
    %c0_1 = arith.constant 0 : index
    %0 = vector.load %arg1[%c0, %c0_0, %c0_1] : memref<1x4x256xf32, #tpu.memory_space<vmem>>, vector<1x4x256xf32>
    %1 = vector.shape_cast %0 : vector<1x4x256xf32> to vector<4x256xf32>
    %cst = arith.constant dense<0.000000e+00> : vector<4xf32>
    %2 = vector.multi_reduction <add>, %1, %cst [1] : vector<4x256xf32> to vector<4xf32>
    %3 = vector.shape_cast %2 : vector<4xf32> to vector<4x1xf32>
    %cst_2 = arith.constant 2.560000e+02 : f32
    %4 = vector.broadcast %cst_2 : f32 to vector<4x1xf32>
    %5 = arith.divf %3, %4 : vector<4x1xf32>
    %cst_3 = arith.constant dense<0xFF800000> : vector<4xf32>
    %6 = vector.multi_reduction <maximumf>, %1, %cst_3 [1] : vector<4x256xf32> to vector<4xf32>
    %7 = vector.shape_cast %6 : vector<4xf32> to vector<4x1xf32>
    %8 = tpu.concatenate %5, %7 in 1 : vector<4x1xf32>, vector<4x1xf32> -> vector<4x2xf32>
    %c0_4 = arith.constant 0 : index
    %c0_5 = arith.constant 0 : index
    %9 = vector.load %arg2[%c0_4, %c0_5] : memref<1x4xf32, #tpu.memory_space<vmem>>, vector<1x4xf32>
    %c0_6 = arith.constant 0 : index
    %c0_7 = arith.constant 0 : index
    %10 = vector.load %arg3[%c0_6, %c0_7] : memref<4x1xf32, #tpu.memory_space<vmem>>, vector<4x1xf32>
    %cst_8 = arith.constant dense<0.000000e+00> : vector<1x2xf32>
    %11 = tpu.matmul %9, %8, %cst_8 {dimension_numbers = #tpu.dot_dimension_numbers<[1], [0], [0], [1], [0, 0, 1, 1], [], []>} : vector<1x4xf32>, vector<4x2xf32>, vector<1x2xf32> -> vector<1x2xf32>
    %cst_9 = arith.constant 0.000000e+00 : f32
    %12 = vector.broadcast %cst_9 : f32 to vector<1x2xf32>
    %13 = arith.maximumf %11, %12 : vector<1x2xf32>
    %cst_10 = arith.constant dense<0.000000e+00> : vector<4x2xf32>
    %14 = tpu.matmul %10, %13, %cst_10 {dimension_numbers = #tpu.dot_dimension_numbers<[1], [0], [0], [1], [0, 0, 1, 1], [], []>} : vector<4x1xf32>, vector<1x2xf32>, vector<4x2xf32> -> vector<4x2xf32>
    %15 = vector.extract_strided_slice %14 {offsets = [0, 0], sizes = [4, 1], strides = [1, 1]} : vector<4x2xf32> to vector<4x1xf32>
    %16 = vector.extract_strided_slice %14 {offsets = [0, 1], sizes = [4, 1], strides = [1, 1]} : vector<4x2xf32> to vector<4x1xf32>
    %17 = arith.addf %15, %16 : vector<4x1xf32>
    %18 = arith.negf %17 : vector<4x1xf32>
    %19 = math.exp %18 : vector<4x1xf32>
    %cst_11 = arith.constant 1.000000e+00 : f32
    %20 = vector.broadcast %cst_11 : f32 to vector<4x1xf32>
    %21 = arith.addf %20, %19 : vector<4x1xf32>
    %22 = arith.divf %20, %21 : vector<4x1xf32>
    %23 = vector.broadcast %22 : vector<4x1xf32> to vector<4x256xf32>
    %24 = arith.mulf %1, %23 : vector<4x256xf32>
    %c0_12 = arith.constant 0 : index
    %c0_13 = arith.constant 0 : index
    %c0_14 = arith.constant 0 : index
    %25 = vector.load %arg4[%c0_12, %c0_13, %c0_14] : memref<1x4x256xf32, #tpu.memory_space<vmem>>, vector<1x4x256xf32>
    %26 = vector.shape_cast %25 : vector<1x4x256xf32> to vector<4x256xf32>
    %27 = vector.shape_cast %24 : vector<4x256xf32> to vector<1x4x256xf32>
    tpu.vector_store %arg4[%c0_12, %c0_13, %c0_14], %27 {strides = array<i32>} : memref<1x4x256xf32, #tpu.memory_space<vmem>>, vector<1x4x256xf32>,
    return
  }
  func.func @transform_0(%arg0: i32) -> (i32, i32, i32) {
    %c0_i32 = arith.constant 0 : i32
    %c0_i32_0 = arith.constant 0 : i32
    %c0_i32_1 = arith.constant 0 : i32
    return %arg0, %c0_i32, %c0_i32_0 : i32, i32, i32
  }
  func.func @transform_1(%arg0: i32) -> (i32, i32) {
    %c0_i32 = arith.constant 0 : i32
    %c0_i32_0 = arith.constant 0 : i32
    %c0_i32_1 = arith.constant 0 : i32
    return %c0_i32, %c0_i32_0 : i32, i32
  }
  func.func @transform_2(%arg0: i32) -> (i32, i32) {
    %c0_i32 = arith.constant 0 : i32
    %c0_i32_0 = arith.constant 0 : i32
    %c0_i32_1 = arith.constant 0 : i32
    return %c0_i32, %c0_i32_0 : i32, i32
  }
  func.func @transform_3(%arg0: i32) -> (i32, i32, i32) {
    %c0_i32 = arith.constant 0 : i32
    %c0_i32_0 = arith.constant 0 : i32
    %c0_i32_1 = arith.constant 0 : i32
    return %arg0, %c0_i32, %c0_i32_0 : i32, i32, i32
  }
}

</mosaic_0001>

<llo_original>
// kernel: tpu_custom_call.1
$region0: #{tpu_custom_call.1}
  #allocation0 [shape = 'u32[]', space=smem, size = 0x4, offset = 0x4, fixed_abs, tag = 'smem constant byte address 0x4 - core index']
  #allocation1 [shape = 'u32[144,128]{1,0:T(1,128)}', space=vmem, size = 0x12000, scoped, tag = 'internal scratch']
  %s0 = inlined_call_operand.hbm [shape: f32[2,4,256], index: 0, kind: input, shape index: {}]
  %s1 = inlined_call_operand.vmem [shape: f32[1,4], index: 1, kind: input, shape index: {}]
  %s2 = inlined_call_operand.vmem [shape: f32[4,1], index: 2, kind: input, shape index: {}]
  %s3 = inlined_call_operand.hbm [shape: f32[2,4,256], index: 3, kind: output, shape index: {}]
  %s4 = sld [smem:[#allocation0]]
  $region49: #{tpu_custom_call.1} parent=0
    _
  %s6 = ssub.s32 1, %s4
  %s7 = scalar_select 0, %s6, %s4
  $region1: #{tpu_custom_call.1} parent=0
    #allocation2 [shape = 'u8[8192]{0}', space=vmem, size = 0x2000, scoped, tag = 'input window, operand 0']
    #allocation3 [shape = 's32[2]{0}', space=sflag, size = 0x8, scoped, tag = 'scoped memory for tpu_custom_call.1']
    #allocation4 [shape = 's32[2]{0}', space=sflag, size = 0x8, scoped, tag = 'scoped memory for tpu_custom_call.1']
    #allocation5 [shape = 'u8[8192]{0}', space=vmem, size = 0x2000, scoped, tag = 'output window, operand 0']
    %8 = vsyncpa [#allocation3], 0
    %s9 = scalar_lea.sflag [#allocation3], 1
    %10 = vsyncpa %s9, 0
    %11 = vsyncpa [#allocation4], 0
    %s12 = scalar_lea.sflag [#allocation4], 1
    %13 = vsyncpa %s12, 0
    loop: start=0, step=1, limit=4
    $region2: #{tpu_custom_call.1} parent=1 // loop_pre_header
      _
    $region3: #{tpu_custom_call.1} parent=1 // loop_header
      %s15 = sphi 0, %s19
      %p16 = scmp.ge.s32.totalorder %s15, 4
      %s25 = sphi 0, %s27
      %s28 = sphi 0, %s25
      %s29 = sphi 0, %s28
      %s45 = sphi 0, %s29
      %s49 = sphi 0, %s49
      %s51 = sphi 0, %s49
      %s52 = sphi 0, %s51
      %s66 = sphi 0, %s52
      %s70 = sphi 0, %s70
      %s72 = sphi 0, %s70
      %s73 = sphi 0, %s72
      %s87 = sphi 0, %s73
      %s93 = sphi 0, %s95
      %s96 = sphi 0, %s93
      %s97 = sphi 0, %s96
      %s113 = sphi 0, %s97
    $region4: #{tpu_custom_call.1} parent=1 // loop_header_branch
      %18 = sbr.rel (%p16) target = $region8
    $region5: #{tpu_custom_call.1} parent=1 // loop_body
      %s20 = ssub.s32 %s15, 1
      %s21 = ssub.s32 %s15, 2
      %s22 = sadd.s32 %s15, 1
      %s23 = ssub.s32 %s15, %s22
      %p24 = scmp.eq.s32.totalorder %s23, 0
      %s26 = sadd.s32 %s25, 1
      %s27 = scalar_select %p24, %s25, %s26
      %p30 = pneg %p24
      %p31 = scmp.eq.s32.totalorder %s15, 1
      %p32 = por %p30, %p31
      %p33 = scmp.ne.s32.totalorder %s25, %s28
      %p34 = scmp.eq.s32.totalorder %s15, 0
      %p35 = por %p33, %p34
      %p36 = scmp.ne.s32.totalorder %s25, %s28
      %p37 = scmp.eq.s32.totalorder %s20, 1
      %p38 = por %p36, %p37
      %p39 = scmp.ne.s32.totalorder %s28, %s29
      %p40 = scmp.eq.s32.totalorder %s20, 0
      %p41 = por %p39, %p40
      %p42 = scmp.ne.s32.totalorder %s28, %s29
      %p43 = scmp.eq.s32.totalorder %s21, 1
      %p44 = por %p42, %p43
      %p46 = scmp.ne.s32.totalorder %s29, %s45
      %p47 = scmp.eq.s32.totalorder %s21, 0
      %p48 = por %p46, %p47
      %s50 = sadd.s32 %s49, 1
      %p53 = scmp.eq.s32.totalorder %s15, 1
      %p54 = scmp.ne.s32.totalorder %s49, %s51
      %p55 = scmp.eq.s32.totalorder %s15, 0
      %p56 = por %p54, %p55
      %p57 = scmp.ne.s32.totalorder %s49, %s51
      %p58 = scmp.eq.s32.totalorder %s20, 1
      %p59 = por %p57, %p58
      %p60 = scmp.ne.s32.totalorder %s51, %s52
      %p61 = scmp.eq.s32.totalorder %s20, 0
      %p62 = por %p60, %p61
      %p63 = scmp.ne.s32.totalorder %s51, %s52
      %p64 = scmp.eq.s32.totalorder %s21, 1
      %p65 = por %p63, %p64
      %p67 = scmp.ne.s32.totalorder %s52, %s66
      %p68 = scmp.eq.s32.totalorder %s21, 0
      %p69 = por %p67, %p68
      %s71 = sadd.s32 %s70, 1
      %p74 = scmp.eq.s32.totalorder %s15, 1
      %p75 = scmp.ne.s32.totalorder %s70, %s72
      %p76 = scmp.eq.s32.totalorder %s15, 0
      %p77 = por %p75, %p76
      %p78 = scmp.ne.s32.totalorder %s70, %s72
      %p79 = scmp.eq.s32.totalorder %s20, 1
      %p80 = por %p78, %p79
      %p81 = scmp.ne.s32.totalorder %s72, %s73
      %p82 = scmp.eq.s32.totalorder %s20, 0
      %p83 = por %p81, %p82
      %p84 = scmp.ne.s32.totalorder %s72, %s73
      %p85 = scmp.eq.s32.totalorder %s21, 1
      %p86 = por %p84, %p85
      %p88 = scmp.ne.s32.totalorder %s73, %s87
      %p89 = scmp.eq.s32.totalorder %s21, 0
      %p90 = por %p88, %p89
      %s91 = ssub.s32 %s15, %s22
      %p92 = scmp.eq.s32.totalorder %s91, 0
      %s94 = sadd.s32 %s93, 1
      %s95 = scalar_select %p92, %s93, %s94
      %p98 = pneg %p92
      %p99 = scmp.eq.s32.totalorder %s15, 1
      %p100 = por %p98, %p99
      %p101 = scmp.ne.s32.totalorder %s93, %s96
      %p102 = scmp.eq.s32.totalorder %s15, 0
      %p103 = por %p101, %p102
      %p104 = scmp.ne.s32.totalorder %s93, %s96
      %p105 = scmp.eq.s32.totalorder %s20, 1
      %p106 = por %p104, %p105
      %p107 = scmp.ne.s32.totalorder %s96, %s97
      %p108 = scmp.eq.s32.totalorder %s20, 0
      %p109 = por %p107, %p108
      %p110 = scmp.ne.s32.totalorder %s96, %s97
      %p111 = scmp.eq.s32.totalorder %s21, 1
      %p112 = por %p110, %p111
      %p114 = scmp.ne.s32.totalorder %s97, %s113
      %p115 = scmp.eq.s32.totalorder %s21, 0
      %p116 = por %p114, %p115
      %p117 = scmp.le.s32.totalorder 1, %s15
      %p118 = scmp.lt.s32.totalorder %s15, 3
      %p119 = pnand %p117, %p118
      %p120 = pneg %p119
      // Predicated region
      $region9: #{tpu_custom_call.1} parent=5 // pred_check
        _
      $region10: #{tpu_custom_call.1} parent=5 // pred_check_branch
        %122 = sbr.rel (%p119) target = $region12
      $region11: #{tpu_custom_call.1} parent=5 // pred_region
        %s123 = ssub.s32 %s15, 1
        // Predicated region
        $region13: #{tpu_custom_call.1} parent=11 // pred_check
          %p124 = pneg %p62
        $region14: #{tpu_custom_call.1} parent=11 // pred_check_branch
          %126 = sbr.rel (%p124) target = $region16
        $region15: #{tpu_custom_call.1} parent=11 // pred_region
          _
        $region16: #{tpu_custom_call.1} parent=11 // pred_fallthru
          _
        // Predicated region
        $region17: #{tpu_custom_call.1} parent=11 // pred_check
          %p127 = pneg %p83
        $region18: #{tpu_custom_call.1} parent=11 // pred_check_branch
          %129 = sbr.rel (%p127) target = $region20
        $region19: #{tpu_custom_call.1} parent=11 // pred_region
          _
        $region20: #{tpu_custom_call.1} parent=11 // pred_fallthru
          _
      $region12: #{tpu_custom_call.1} parent=5 // pred_fallthru
        _
      %p130 = scmp.lt.s32.totalorder %s15, 2
      // Predicated region
      $region21: #{tpu_custom_call.1} parent=5 // pred_check
        %p131 = pneg %p130
      $region22: #{tpu_custom_call.1} parent=5 // pred_check_branch
        %133 = sbr.rel (%p131) target = $region24
      $region23: #{tpu_custom_call.1} parent=5 // pred_region
        // Predicated region
        $region25: #{tpu_custom_call.1} parent=23 // pred_check
          %p134 = pneg %p35
        $region26: #{tpu_custom_call.1} parent=23 // pred_check_branch
          %136 = sbr.rel (%p134) target = $region28
        $region27: #{tpu_custom_call.1} parent=23 // pred_region
          %s137 = sand.u32 %s25, 1
          %s138 = scalar_lea.sflag [#allocation3], %s137
          %s139 = sand.u32 %s25, 1
          %s140 = smul.addr %s139, 8
          %s141 = scalar_lea.vmem [#allocation2], %s140
          %s143 = ssub.s32 128, 128
          %144 = vsyncadd %s138, %s143
          %s145 = smul.addr %s15, 2
          %s146 = smul.addr %s145, 64
          %s147 = scalar_lea.hbm %s0, %s146
          %s149 = sshll.u32 %s141, 4
          %s150 = int_to_ptr.vmem [resolvable:$true] %s149
          %152 = dma.hbm_to_vmem [thread:$0]  %s147, 128, %s150, %s138
        $region28: #{tpu_custom_call.1} parent=23 // pred_fallthru
          _
      $region24: #{tpu_custom_call.1} parent=5 // pred_fallthru
        _
      %p153 = scmp.le.s32.totalorder 1, %s15
      %p154 = scmp.lt.s32.totalorder %s15, 3
      %p155 = pnand %p153, %p154
      %p156 = pneg %p155
      // Predicated region
      $region29: #{tpu_custom_call.1} parent=5 // pred_check
        _
      $region30: #{tpu_custom_call.1} parent=5 // pred_check_branch
        %158 = sbr.rel (%p155) target = $region32
      $region31: #{tpu_custom_call.1} parent=5 // pred_region
        %s159 = ssub.s32 %s15, 1
        %s160 = sand.u32 %s28, 1
        %s161 = scalar_lea.sflag [#allocation3], %s160
        %s162 = sand.u32 %s28, 1
        %s163 = smul.addr %s162, 8
        %s164 = scalar_lea.vmem [#allocation2], %s163
        // Predicated region
        $region33: #{tpu_custom_call.1} parent=31 // pred_check
          %p165 = pneg %p41
        $region34: #{tpu_custom_call.1} parent=31 // pred_check_branch
          %167 = sbr.rel (%p165) target = $region36
        $region35: #{tpu_custom_call.1} parent=31 // pred_region
          %168 = dma.done %s161, 128
        $region36: #{tpu_custom_call.1} parent=31 // pred_fallthru
          _
        %s169 = sand.u32 %s28, 1
        %s170 = scalar_lea.sflag [#allocation3], %s169
        %s171 = sand.u32 %s28, 1
        %s172 = smul.addr %s171, 8
        %s173 = scalar_lea.vmem [#allocation2], %s172
        %p174 = pneg %p41
        %p175 = pneg %p38
        %p176 = pneg %p62
        %p177 = pneg %p59
        %p178 = pneg %p83
        %p179 = pneg %p80
        %p180 = pneg %p109
        %p181 = pneg %p106
        %s182 = sand.u32 %s96, 1
        %s183 = scalar_lea.sflag [#allocation4], %s182
        %s184 = sand.u32 %s96, 1
        %s185 = smul.addr %s184, 8
        %s186 = scalar_lea.vmem [#allocation5], %s185
        %v187 = vld [vmem:[%s164] sm:$0xff]
        %v189 = vcombine.high %v187, %v187
        %vm191 = vcmask 1043456
        %v192 = vsel %vm191, %v187, 0.0
        %v193 = vsel %vm191, %v189, 0.0
        %v194 = vadd.f32 %v192, %v193
        %195 = vadd.xlane.f32.xlu0 %v194
        %v196 = vpop.xlane.xlu0 %195
        %v197 = vrcp.pop 256.0
        %v198 = vmul.f32 %v196, %v197
        %v199 = vsel %vm191, %v187, -inf
        %v200 = vsel %vm191, %v189, -inf
        %v201 = vmax.f32 %v199, %v200
        %202 = vmax.xlane.f32.xlu0 %v201
        %v203 = vpop.xlane.xlu0 %202
        %vm204 = vcmask 7168
        %v205 = vsel %vm204, %v198, %v203
        %v206 = vld [vmem:[%s1] sm:$0x1]
        %v207 = vld [vmem:[%s2] sm:$0xf]
        %vm208 = vcmask 31744
        %v210 = vsel %vm208, %v206, 0
        %v213 = vsel %vm191, %v205, 0
        %215 = vmatprep.subr.mxu0 0.0
        %216 = vmatpush1.msra.mxu0 0.0
        %217 = vmatprep.subr.mxu0 0.0
        %218 = vmatpush1.msra.mxu0 0.0
        %219 = vmatprep.subr.mxu0 0.0
        %220 = vmatpush1.msra.mxu0 0.0
        %221 = vmatprep.subr.mxu0 0.0
        %222 = vmatpush1.msra.mxu0 0.0
        %223 = vmatprep.subr.mxu0 0.0
        %224 = vmatpush1.msra.mxu0 0.0
        %225 = vmatprep.subr.mxu0 0.0
        %226 = vmatpush1.msra.mxu0 0.0
        %227 = vmatprep.subr.mxu0 0.0
        %228 = vmatpush1.msra.mxu0 0.0
        %229 = vmatprep.subr.mxu0 0.0
        %230 = vmatpush1.msra.mxu0 0.0
        %231 = vmatprep.subr.mxu0 0.0
        %232 = vmatpush1.msra.mxu0 0.0
        %233 = vmatprep.subr.mxu0 0.0
        %234 = vmatpush1.msra.mxu0 0.0
        %235 = vmatprep.subr.mxu0 0.0
        %236 = vmatpush1.msra.mxu0 0.0
        %237 = vmatprep.subr.mxu0 0.0
        %238 = vmatpush1.msra.mxu0 0.0
        %239 = vmatprep.subr.mxu0 0.0
        %240 = vmatpush1.msra.mxu0 0.0
        %241 = vmatprep.subr.mxu0 0.0
        %242 = vmatpush1.msra.mxu0 0.0
        %243 = vmatprep.subr.mxu0 0.0
        %244 = vmatpush1.msra.mxu0 0.0
        %245 = vmatprep.subr.mxu0 0.0
        %246 = vmatpush1.msra.mxu0 %v213
        %247 = vmatprep.subr.mxu0 0.0
        %248 = vmatpush2.msra.mxu0 0.0
        %249 = vmatprep.subr.mxu0 0.0
        %250 = vmatpush2.msra.mxu0 0.0
        %251 = vmatprep.subr.mxu0 0.0
        %252 = vmatpush2.msra.mxu0 0.0
        %253 = vmatprep.subr.mxu0 0.0
        %254 = vmatpush2.msra.mxu0 0.0
        %255 = vmatprep.subr.mxu0 0.0
        %256 = vmatpush2.msra.mxu0 0.0
        %257 = vmatprep.subr.mxu0 0.0
        %258 = vmatpush2.msra.mxu0 0.0
        %259 = vmatprep.subr.mxu0 0.0
        %260 = vmatpush2.msra.mxu0 0.0
        %261 = vmatprep.subr.mxu0 0.0
        %262 = vmatpush2.msra.mxu0 0.0
        %263 = vmatprep.subr.mxu0 0.0
        %264 = vmatpush2.msra.mxu0 0.0
        %265 = vmatprep.subr.mxu0 0.0
        %266 = vmatpush2.msra.mxu0 0.0
        %267 = vmatprep.subr.mxu0 0.0
        %268 = vmatpush2.msra.mxu0 0.0
        %269 = vmatprep.subr.mxu0 0.0
        %270 = vmatpush2.msra.mxu0 0.0
        %271 = vmatprep.subr.mxu0 0.0
        %272 = vmatpush2.msra.mxu0 0.0
        %273 = vmatprep.subr.mxu0 0.0
        %274 = vmatpush2.msra.mxu0 0.0
        %275 = vmatprep.subr.mxu0 0.0
        %276 = vmatpush2.msra.mxu0 0.0
        %277 = vmatprep.subr.mxu0 0.0
        %278 = vmatpush2.msra.mxu0 0.0
        %279 = vmatprep.mubr.f32.mxu0 0.0
        %280 = vmatmul.mubr.f32.gmra.mxu0 %v210
        %v281 = vpop.f32.mrf.mxu0
        %v282 = vadd.f32 0.0, %v281
        %v283 = vpop.f32.mrf.mxu0
        %284 = vdwg.mxu0
        %v285 = vmax.f32 %v282, 0.0
        %v287 = vsel %vm204, %v207, 0
        %vm289 = vcmask 1040384
        %v291 = vsel %vm289, %v285, 0
        %293 = vmatprep.subr.mxu0 0.0
        %294 = vmatpush1.msra.mxu0 0.0
        %295 = vmatprep.subr.mxu0 0.0
        %296 = vmatpush1.msra.mxu0 0.0
        %297 = vmatprep.subr.mxu0 0.0
        %298 = vmatpush1.msra.mxu0 0.0
        %299 = vmatprep.subr.mxu0 0.0
        %300 = vmatpush1.msra.mxu0 0.0
        %301 = vmatprep.subr.mxu0 0.0
        %302 = vmatpush1.msra.mxu0 0.0
        %303 = vmatprep.subr.mxu0 0.0
        %304 = vmatpush1.msra.mxu0 0.0
        %305 = vmatprep.subr.mxu0 0.0
        %306 = vmatpush1.msra.mxu0 0.0
        %307 = vmatprep.subr.mxu0 0.0
        %308 = vmatpush1.msra.mxu0 0.0
        %309 = vmatprep.subr.mxu0 0.0
        %310 = vmatpush1.msra.mxu0 0.0
        %311 = vmatprep.subr.mxu0 0.0
        %312 = vmatpush1.msra.mxu0 0.0
        %313 = vmatprep.subr.mxu0 0.0
        %314 = vmatpush1.msra.mxu0 0.0
        %315 = vmatprep.subr.mxu0 0.0
        %316 = vmatpush1.msra.mxu0 0.0
        %317 = vmatprep.subr.mxu0 0.0
        %318 = vmatpush1.msra.mxu0 0.0
        %319 = vmatprep.subr.mxu0 0.0
        %320 = vmatpush1.msra.mxu0 0.0
        %321 = vmatprep.subr.mxu0 0.0
        %322 = vmatpush1.msra.mxu0 0.0
        %323 = vmatprep.subr.mxu0 0.0
        %324 = vmatpush1.msra.mxu0 %v291
        %325 = vmatprep.subr.mxu0 0.0
        %326 = vmatpush2.msra.mxu0 0.0
        %327 = vmatprep.subr.mxu0 0.0
        %328 = vmatpush2.msra.mxu0 0.0
        %329 = vmatprep.subr.mxu0 0.0
        %330 = vmatpush2.msra.mxu0 0.0
        %331 = vmatprep.subr.mxu0 0.0
        %332 = vmatpush2.msra.mxu0 0.0
        %333 = vmatprep.subr.mxu0 0.0
        %334 = vmatpush2.msra.mxu0 0.0
        %335 = vmatprep.subr.mxu0 0.0
        %336 = vmatpush2.msra.mxu0 0.0
        %337 = vmatprep.subr.mxu0 0.0
        %338 = vmatpush2.msra.mxu0 0.0
        %339 = vmatprep.subr.mxu0 0.0
        %340 = vmatpush2.msra.mxu0 0.0
        %341 = vmatprep.subr.mxu0 0.0
        %342 = vmatpush2.msra.mxu0 0.0
        %343 = vmatprep.subr.mxu0 0.0
        %344 = vmatpush2.msra.mxu0 0.0
        %345 = vmatprep.subr.mxu0 0.0
        %346 = vmatpush2.msra.mxu0 0.0
        %347 = vmatprep.subr.mxu0 0.0
        %348 = vmatpush2.msra.mxu0 0.0
        %349 = vmatprep.subr.mxu0 0.0
        %350 = vmatpush2.msra.mxu0 0.0
        %351 = vmatprep.subr.mxu0 0.0
        %352 = vmatpush2.msra.mxu0 0.0
        %353 = vmatprep.subr.mxu0 0.0
        %354 = vmatpush2.msra.mxu0 0.0
        %355 = vmatprep.subr.mxu0 0.0
        %356 = vmatpush2.msra.mxu0 0.0
        %357 = vmatprep.mubr.f32.mxu0 0.0
        %358 = vmatmul.mubr.f32.gmra.mxu0 %v287
        %v359 = vpop.f32.mrf.mxu0
        %v360 = vadd.f32 0.0, %v359
        %v361 = vpop.f32.mrf.mxu0
        %362 = vdwg.mxu0
        %364 = vrot.lane.b32.xlu0 %v360, 127
        %v365 = vpop.permute.xlu0 %364
        %v367 = vadd.f32 %v360, %v365
        %v368 = vxor.u32 %v367, 2147483648
        %v369 = vmul.f32 %v368, 1.442695
        %v370 = vpow.pop %v369
        %v371 = vadd.f32 %v370, 1.0
        %v372 = vrcp.pop %v371
        %v373 = vmul.f32 1.0, %v372
        %375 = vset.pattern.permute.xlu0 0
        %376 = vperm.xlu0 %375, %v373
        %v377 = vpop.permute.xlu0 %376
        %v379 = vunpack.c.l.s4 839922192
        %v380 = vunpack.c.0.s8 %v379
        %v381 = vlaneseq
        %v382 = vshrl.u32 %v381, 7
        %v383 = vsub.s32 %v380, %v382
        %v384 = vrot.slane %v377, %v383
        %v386 = vmul.f32 %v187, %v384
        %387 = vst [vmem:[%s186] sm:$0xff] %v386
        %s388 = sand.u32 %s96, 1
        %s389 = scalar_lea.sflag [#allocation4], %s388
        %s390 = sand.u32 %s96, 1
        %s391 = smul.addr %s390, 8
        %s392 = scalar_lea.vmem [#allocation5], %s391
        // Predicated region
        $region37: #{tpu_custom_call.1} parent=31 // pred_check
          %p393 = pneg %p106
        $region38: #{tpu_custom_call.1} parent=31 // pred_check_branch
          %395 = sbr.rel (%p393) target = $region40
        $region39: #{tpu_custom_call.1} parent=31 // pred_region
          %s397 = ssub.s32 128, 128
          %398 = vsyncadd %s389, %s397
          %s399 = smul.addr %s20, 2
          %s400 = smul.addr %s399, 64
          %s401 = scalar_lea.hbm %s3, %s400
          %s403 = sshll.u32 %s392, 4
          %s404 = int_to_ptr.vmem [resolvable:$true] %s403
          %406 = dma.vmem_to_hbm [thread:$0]  %s404, 128, %s401, %s389
        $region40: #{tpu_custom_call.1} parent=31 // pred_fallthru
          _
      $region32: #{tpu_custom_call.1} parent=5 // pred_fallthru
        _
      %p407 = scmp.le.s32.totalorder 2, %s15
      // Predicated region
      $region41: #{tpu_custom_call.1} parent=5 // pred_check
        %p408 = pneg %p407
      $region42: #{tpu_custom_call.1} parent=5 // pred_check_branch
        %410 = sbr.rel (%p408) target = $region44
      $region43: #{tpu_custom_call.1} parent=5 // pred_region
        %s411 = ssub.s32 %s15, 2
        // Predicated region
        $region45: #{tpu_custom_call.1} parent=43 // pred_check
          %p412 = pneg %p112
        $region46: #{tpu_custom_call.1} parent=43 // pred_check_branch
          %414 = sbr.rel (%p412) target = $region48
        $region47: #{tpu_custom_call.1} parent=43 // pred_region
          %s415 = sand.u32 %s97, 1
          %s416 = scalar_lea.sflag [#allocation4], %s415
          %s417 = sand.u32 %s97, 1
          %s418 = smul.addr %s417, 8
          %s419 = scalar_lea.vmem [#allocation5], %s418
          %420 = dma.done %s416, 128
        $region48: #{tpu_custom_call.1} parent=43 // pred_fallthru
          _
      $region44: #{tpu_custom_call.1} parent=5 // pred_fallthru
        _
    $region6: #{tpu_custom_call.1} parent=1 // loop_footer
      %s19 = sadd.s32 1, %s15
    $region7: #{tpu_custom_call.1} parent=1 // loop_footer_branch
      %14 = sbr.rel target = $region3
    $region8: #{tpu_custom_call.1} parent=1 // loop_exit
      _
    %421 = vsyncpa [#allocation3], 1
    %s422 = scalar_lea.sflag [#allocation3], 1
    %423 = vsyncpa %s422, 1
    %424 = vsyncpa [#allocation4], 1
    %s425 = scalar_lea.sflag [#allocation4], 1
    %426 = vsyncpa %s425, 1

</llo_original>
